<compile_context>
chip_gen: v5e
topology: v5e:2x2
jax: 0.10.0
libtpu: 0.0.40
codegen_flags: <defaults>
</compile_context>

<pallas_src>
import jax
import jax.numpy as jnp
from jax.experimental import pallas as pl
from jax.experimental.pallas import tpu as pltpu


def _round_down(x, m):
    return (x // m) * m


def _make_kernel(tr, rows):
    """Kernel factory: tr / rows are Python ints baked into the body."""
    single_row_block = (tr == rows)

    def kernel(mul_ref, add_ref, x_ref, o_ref):
        # mul_ref/add_ref: (rows, 1) f32 per-row constants, fully resident
        #                  (constant block index -> DMA'd once).
        # x_ref/o_ref:     (tr, tl) tile of the flattened (N*C, H*W) array.
        if single_row_block:
            mul = mul_ref[...]
            add = add_ref[...]
        else:
            # tr is a multiple of the sublane granularity (>= 8), so the
            # dynamic slice start is sublane-aligned.
            r0 = pl.multiple_of(pl.program_id(0) * tr, 8)
            mul = mul_ref[pl.ds(r0, tr), :]
            add = add_ref[pl.ds(r0, tr), :]
        x = x_ref[...].astype(jnp.float32)
        o_ref[...] = (x * mul + add).astype(o_ref.dtype)

    return kernel


def _pick_tiles(rows, lanes, itemsize, target_bytes):
    """Choose (row_tile, lane_tile): lane-dense, tr | rows, tl | lanes, and
    tr*tl*itemsize <= target_bytes whenever the shape allows it."""
    # Sublane granularity: sub-32-bit dtypes pack along sublanes
    # (f32 -> 8, bf16 -> 16, int8/fp8 -> 32).
    gran = max(8, 32 // itemsize)

    # Lane (last-dim) tile: large multiple of 128 dividing `lanes`, capped so
    # `gran` rows of it fit the byte budget.  Odd spatial sizes fall back to
    # the full dim (always a legal block shape).
    if lanes % 128 == 0:
        cap = max(128, _round_down(target_bytes // (gran * itemsize), 128))
        tl = min(lanes, cap)
        while lanes % tl != 0:
            tl -= 128
    else:
        tl = lanes

    # Row (second-to-last) tile: multiple of `gran` dividing `rows`, sized to
    # fill the remaining byte budget; full dim otherwise.
    if rows % gran == 0:
        max_rows = max(gran, _round_down(target_bytes // (tl * itemsize), gran))
        tr = min(rows, max_rows)
        while rows % tr != 0:
            tr -= gran
    else:
        tr = rows
        # Budget enforcement on the fallback path: clamp the lane tile so the
        # block still fits target_bytes (e.g. N*C = 99 would otherwise produce
        # a block whose double-buffered footprint exceeds the VMEM limit).
        if lanes % 128 == 0 and tr * tl * itemsize > target_bytes:
            max_lanes = max(128, _round_down(target_bytes // (tr * itemsize), 128))
            tl = min(tl, max_lanes)
            while lanes % tl != 0:
                tl -= 128
        # TODO(synk): if BOTH rows % gran != 0 and lanes % 128 != 0 the whole
        # array becomes one block; pad rows to a multiple of 8 in the wrapper
        # for that (rare) huge-odd-shape corner case.

    # Megacore (v7x has 2 TensorCores): guarantee >= 2 blocks to shard when
    # the shape allows it.
    if rows // tr == 1 and lanes // tl == 1:
        if lanes % 256 == 0:
            tl = lanes // 2          # multiple of 128, divides lanes
        elif rows % (2 * gran) == 0:
            tr = rows // 2           # multiple of gran, divides rows
    return tr, tl


def scaling_layer(x, shift, scale, *, target_block_bytes=4 << 20):
    """(x - shift) / scale with per-channel shift/scale buffers (NCHW)."""
    N, C, H, W = x.shape
    assert shift.shape == (C,) and scale.shape == (C,)

    rows, lanes = N * C, H * W
    x2 = x.reshape(rows, lanes)              # contiguous flatten: metadata only

    # Fold the divide into one broadcast FMA: (x - shift)/scale = x*mul + add.
    # 3-element precompute expanded to (rows, 1); stays tiny (N*C elements).
    mul_c = (1.0 / scale).astype(jnp.float32)
    add_c = (-shift / scale).astype(jnp.float32)
    mul_r = jnp.tile(mul_c, N).reshape(rows, 1)
    add_r = jnp.tile(add_c, N).reshape(rows, 1)

    itemsize = jnp.dtype(x.dtype).itemsize
    tr, tl = _pick_tiles(rows, lanes, itemsize, target_block_bytes)
    grid = (rows // tr, lanes // tl)

    # Derive the VMEM limit from the actual pipeline footprint:
    # double-buffered input + output tiles, plus the resident per-row
    # constant arrays (sublane-padded to 8, lane-padded to 128, f32).
    block_bytes = tr * tl * itemsize
    const_bytes = 2 * 2 * (-(-rows // 8) * 8) * 128 * 4
    footprint = 2 * 2 * block_bytes + const_bytes
    vmem_limit = max(16 << 20, min(48 << 20, footprint + (2 << 20)))
    vmem_limit = max(vmem_limit, footprint + (1 << 20))  # never under-provision

    out2 = pl.pallas_call(
        _make_kernel(tr, rows),
        out_shape=jax.ShapeDtypeStruct((rows, lanes), x.dtype),
        grid_spec=pl.GridSpec(
            grid=grid,
            in_specs=[
                # Fully resident constants: single block, constant index map.
                pl.BlockSpec((rows, 1), lambda i, j: (0, 0)),
                pl.BlockSpec((rows, 1), lambda i, j: (0, 0)),
                # Input tile.
                pl.BlockSpec((tr, tl), lambda i, j: (i, j)),
            ],
            out_specs=pl.BlockSpec((tr, tl), lambda i, j: (i, j)),
        ),
        compiler_params=pltpu.CompilerParams(
            dimension_semantics=("parallel", "parallel"),
            vmem_limit_bytes=int(vmem_limit),
        ),
    )(mul_r, add_r, x2)
    return out2.reshape(N, C, H, W)


if __name__ == "__main__":
    # Registered buffers of ScalingLayer (RGB, hence C=3).
    shift = jnp.array([-0.030, -0.088, -0.188], dtype=jnp.float32)
    scale = jnp.array([0.458, 0.448, 0.450], dtype=jnp.float32)

    def ref_fn(x):
        xf = x.astype(jnp.float32)
        r = (xf - shift[None, :, None, None]) / scale[None, :, None, None]
        return r.astype(x.dtype)

    key = jax.random.PRNGKey(0)
    cases = [
        # (shape, dtype, target_block_bytes, atol, rtol)
        ((2, 3, 16, 16), jnp.float32, 4 << 20, 1e-5, 1e-5),   # lane-split (1,2) grid
        ((3, 3, 17, 7), jnp.float32, 4 << 20, 1e-5, 1e-5),    # odd H*W fallback, (1,1)
        ((8, 3, 16, 32), jnp.bfloat16, 4 << 20, 2e-2, 2e-2),  # bf16, lane-split grid
        ((32, 3, 8, 32), jnp.float32, 64 << 10, 1e-5, 1e-5),  # multi row-block pipeline
    ]
    for shape, dtype, tbb, atol, rtol in cases:
        key, sub = jax.random.split(key)
        x = jax.random.normal(sub, shape, dtype=jnp.float32).astype(dtype)
        out = jax.block_until_ready(
            scaling_layer(x, shift, scale, target_block_bytes=tbb))
        ref = ref_fn(x)
        assert out.shape == x.shape and out.dtype == x.dtype
        ok = jnp.allclose(out.astype(jnp.float32), ref.astype(jnp.float32),
                          atol=atol, rtol=rtol)
        assert bool(ok), (shape, str(dtype),
                          float(jnp.max(jnp.abs(out.astype(jnp.float32)
                                                - ref.astype(jnp.float32)))))

    print("KERNEL_OK")
</pallas_src>

<mosaic_0001>
module attributes {stable_mosaic.version = 11 : i64} {
  func.func @kernel(%arg0: i32, %arg1: i32, %arg2: memref<6x1xf32, #tpu.memory_space<vmem>>, %arg3: memref<6x1xf32, #tpu.memory_space<vmem>>, %arg4: memref<6x128xf32, #tpu.memory_space<vmem>>, %arg5: memref<6x128xf32, #tpu.memory_space<vmem>>) attributes {dimension_semantics = [#tpu.dimension_semantics<parallel>, #tpu.dimension_semantics<parallel>], iteration_bounds = array<i64: 1, 2>, scalar_prefetch = 0 : i64, scratch_operands = 0 : i64, tpu.core_type = #tpu.core_type<tc>, window_params = [{pipeline_mode = #tpu.pipeline_mode<synchronous>, transform_indices = @transform_0, window_bounds = array<i64: 6, 1>}, {pipeline_mode = #tpu.pipeline_mode<synchronous>, transform_indices = @transform_1, window_bounds = array<i64: 6, 1>}, {transform_indices = @transform_2, window_bounds = array<i64: 6, 128>}, {transform_indices = @transform_3, window_bounds = array<i64: 6, 128>}]} {
    %c0 = arith.constant 0 : index
    %c0_0 = arith.constant 0 : index
    %0 = vector.load %arg2[%c0, %c0_0] : memref<6x1xf32, #tpu.memory_space<vmem>>, vector<6x1xf32>
    %c0_1 = arith.constant 0 : index
    %c0_2 = arith.constant 0 : index
    %1 = vector.load %arg3[%c0_1, %c0_2] : memref<6x1xf32, #tpu.memory_space<vmem>>, vector<6x1xf32>
    %c0_3 = arith.constant 0 : index
    %c0_4 = arith.constant 0 : index
    %2 = vector.load %arg4[%c0_3, %c0_4] : memref<6x128xf32, #tpu.memory_space<vmem>>, vector<6x128xf32>
    %3 = vector.broadcast %0 : vector<6x1xf32> to vector<6x128xf32>
    %4 = arith.mulf %2, %3 : vector<6x128xf32>
    %5 = vector.broadcast %1 : vector<6x1xf32> to vector<6x128xf32>
    %6 = arith.addf %4, %5 : vector<6x128xf32>
    %c0_5 = arith.constant 0 : index
    %c0_6 = arith.constant 0 : index
    %7 = vector.load %arg5[%c0_5, %c0_6] : memref<6x128xf32, #tpu.memory_space<vmem>>, vector<6x128xf32>
    tpu.vector_store %arg5[%c0_5, %c0_6], %6 {strides = array<i32>} : memref<6x128xf32, #tpu.memory_space<vmem>>, vector<6x128xf32>,
    return
  }
  func.func @transform_0(%arg0: i32, %arg1: i32) -> (i32, i32) {
    %c0_i32 = arith.constant 0 : i32
    %c0_i32_0 = arith.constant 0 : i32
    %c0_i32_1 = arith.constant 0 : i32
    return %c0_i32, %c0_i32_0 : i32, i32
  }
  func.func @transform_1(%arg0: i32, %arg1: i32) -> (i32, i32) {
    %c0_i32 = arith.constant 0 : i32
    %c0_i32_0 = arith.constant 0 : i32
    %c0_i32_1 = arith.constant 0 : i32
    return %c0_i32, %c0_i32_0 : i32, i32
  }
  func.func @transform_2(%arg0: i32, %arg1: i32) -> (i32, i32) {
    %c0_i32 = arith.constant 0 : i32
    return %arg0, %arg1 : i32, i32
  }
  func.func @transform_3(%arg0: i32, %arg1: i32) -> (i32, i32) {
    %c0_i32 = arith.constant 0 : i32
    return %arg0, %arg1 : i32, i32
  }
}

</mosaic_0001>

<llo_original>
// kernel: tpu_custom_call.1
$region0: #{tpu_custom_call.1}
  #allocation0 [shape = 'u32[]', space=smem, size = 0x4, offset = 0x4, fixed_abs, tag = 'smem constant byte address 0x4 - core index']
  #allocation1 [shape = 'u32[72,128]{1,0:T(1,128)}', space=vmem, size = 0x9000, scoped, tag = 'internal scratch']
  %s0 = inlined_call_operand.vmem [shape: f32[6,1], index: 0, kind: input, shape index: {}]
  %s1 = inlined_call_operand.vmem [shape: f32[6,1], index: 1, kind: input, shape index: {}]
  %s2 = inlined_call_operand.vmem [shape: f32[6,256], index: 2, kind: input, shape index: {}]
  %s3 = inlined_call_operand.hbm [shape: f32[6,256], index: 3, kind: output, shape index: {}]
  %s4 = sld [smem:[#allocation0]]
  $region45: #{tpu_custom_call.1} parent=0
    _
  %s6 = ssub.s32 1, %s4
  %s7 = scalar_select 0, %s6, %s4
  $region1: #{tpu_custom_call.1} parent=0
    #allocation2 [shape = 'u8[8192]{0}', space=vmem, size = 0x2000, scoped, tag = 'output window, operand 0']
    #allocation3 [shape = 's32[2]{0}', space=sflag, size = 0x8, scoped, tag = 'scoped memory for tpu_custom_call.1']
    %8 = vsyncpa [#allocation3], 0
    %s9 = scalar_lea.sflag [#allocation3], 1
    %10 = vsyncpa %s9, 0
    loop: start=0, step=1, limit=4
    $region2: #{tpu_custom_call.1} parent=1 // loop_pre_header
      _
    $region3: #{tpu_custom_call.1} parent=1 // loop_header
      %s12 = sphi 0, %s16
      %p13 = scmp.ge.s32.totalorder %s12, 4
      %s19 = sphi 0, %s31
      %s20 = sphi 0, %s27
      %s21 = sphi 0, %s19
      %s22 = sphi 0, %s20
      %s23 = sphi 0, %s21
      %s24 = sphi 0, %s22
      %s32 = sphi 0, %s32
      %s34 = sphi 0, %s32
      %s35 = sphi 0, %s34
      %s49 = sphi 0, %s35
      %s53 = sphi 0, %s53
      %s55 = sphi 0, %s53
      %s56 = sphi 0, %s55
      %s70 = sphi 0, %s56
      %s78 = sphi 0, %s80
      %s81 = sphi 0, %s78
      %s82 = sphi 0, %s81
      %s98 = sphi 0, %s82
      %s106 = sphi 0, %s108
      %s109 = sphi 0, %s106
      %s110 = sphi 0, %s109
      %s126 = sphi 0, %s110
    $region4: #{tpu_custom_call.1} parent=1 // loop_header_branch
      %15 = sbr.rel (%p13) target = $region8
    $region5: #{tpu_custom_call.1} parent=1 // loop_body
      %s17 = ssub.s32 %s12, 1
      %s18 = ssub.s32 %s12, 2
      %s25 = sadd.s32 1, %s20
      %p26 = scmp.ge.s32.totalorder %s25, 2
      %s27 = scalar_select %p26, 0, %s25
      %s28 = sadd.s32 1, %s19
      %s29 = scalar_select %p26, %s28, %s19
      %p30 = scmp.ge.s32.totalorder %s29, 1
      %s31 = scalar_select %p30, 0, %s29
      %s33 = sadd.s32 %s32, 1
      %p36 = scmp.eq.s32.totalorder %s12, 1
      %p37 = scmp.ne.s32.totalorder %s32, %s34
      %p38 = scmp.eq.s32.totalorder %s12, 0
      %p39 = por %p37, %p38
      %p40 = scmp.ne.s32.totalorder %s32, %s34
      %p41 = scmp.eq.s32.totalorder %s17, 1
      %p42 = por %p40, %p41
      %p43 = scmp.ne.s32.totalorder %s34, %s35
      %p44 = scmp.eq.s32.totalorder %s17, 0
      %p45 = por %p43, %p44
      %p46 = scmp.ne.s32.totalorder %s34, %s35
      %p47 = scmp.eq.s32.totalorder %s18, 1
      %p48 = por %p46, %p47
      %p50 = scmp.ne.s32.totalorder %s35, %s49
      %p51 = scmp.eq.s32.totalorder %s18, 0
      %p52 = por %p50, %p51
      %s54 = sadd.s32 %s53, 1
      %p57 = scmp.eq.s32.totalorder %s12, 1
      %p58 = scmp.ne.s32.totalorder %s53, %s55
      %p59 = scmp.eq.s32.totalorder %s12, 0
      %p60 = por %p58, %p59
      %p61 = scmp.ne.s32.totalorder %s53, %s55
      %p62 = scmp.eq.s32.totalorder %s17, 1
      %p63 = por %p61, %p62
      %p64 = scmp.ne.s32.totalorder %s55, %s56
      %p65 = scmp.eq.s32.totalorder %s17, 0
      %p66 = por %p64, %p65
      %p67 = scmp.ne.s32.totalorder %s55, %s56
      %p68 = scmp.eq.s32.totalorder %s18, 1
      %p69 = por %p67, %p68
      %p71 = scmp.ne.s32.totalorder %s56, %s70
      %p72 = scmp.eq.s32.totalorder %s18, 0
      %p73 = por %p71, %p72
      %s74 = ssub.s32 %s19, %s31
      %s75 = ssub.s32 %s20, %s27
      %s76 = sor.u32 %s74, %s75
      %p77 = scmp.eq.s32.totalorder %s76, 0
      %s79 = sadd.s32 %s78, 1
      %s80 = scalar_select %p77, %s78, %s79
      %p83 = pneg %p77
      %p84 = scmp.eq.s32.totalorder %s12, 1
      %p85 = por %p83, %p84
      %p86 = scmp.ne.s32.totalorder %s78, %s81
      %p87 = scmp.eq.s32.totalorder %s12, 0
      %p88 = por %p86, %p87
      %p89 = scmp.ne.s32.totalorder %s78, %s81
      %p90 = scmp.eq.s32.totalorder %s17, 1
      %p91 = por %p89, %p90
      %p92 = scmp.ne.s32.totalorder %s81, %s82
      %p93 = scmp.eq.s32.totalorder %s17, 0
      %p94 = por %p92, %p93
      %p95 = scmp.ne.s32.totalorder %s81, %s82
      %p96 = scmp.eq.s32.totalorder %s18, 1
      %p97 = por %p95, %p96
      %p99 = scmp.ne.s32.totalorder %s82, %s98
      %p100 = scmp.eq.s32.totalorder %s18, 0
      %p101 = por %p99, %p100
      %s102 = ssub.s32 %s19, %s31
      %s103 = ssub.s32 %s20, %s27
      %s104 = sor.u32 %s102, %s103
      %p105 = scmp.eq.s32.totalorder %s104, 0
      %s107 = sadd.s32 %s106, 1
      %s108 = scalar_select %p105, %s106, %s107
      %p111 = pneg %p105
      %p112 = scmp.eq.s32.totalorder %s12, 1
      %p113 = por %p111, %p112
      %p114 = scmp.ne.s32.totalorder %s106, %s109
      %p115 = scmp.eq.s32.totalorder %s12, 0
      %p116 = por %p114, %p115
      %p117 = scmp.ne.s32.totalorder %s106, %s109
      %p118 = scmp.eq.s32.totalorder %s17, 1
      %p119 = por %p117, %p118
      %p120 = scmp.ne.s32.totalorder %s109, %s110
      %p121 = scmp.eq.s32.totalorder %s17, 0
      %p122 = por %p120, %p121
      %p123 = scmp.ne.s32.totalorder %s109, %s110
      %p124 = scmp.eq.s32.totalorder %s18, 1
      %p125 = por %p123, %p124
      %p127 = scmp.ne.s32.totalorder %s110, %s126
      %p128 = scmp.eq.s32.totalorder %s18, 0
      %p129 = por %p127, %p128
      %p130 = scmp.le.s32.totalorder 1, %s12
      %p131 = scmp.lt.s32.totalorder %s12, 3
      %p132 = pnand %p130, %p131
      %p133 = pneg %p132
      // Predicated region
      $region9: #{tpu_custom_call.1} parent=5 // pred_check
        _
      $region10: #{tpu_custom_call.1} parent=5 // pred_check_branch
        %135 = sbr.rel (%p132) target = $region12
      $region11: #{tpu_custom_call.1} parent=5 // pred_region
        %s136 = ssub.s32 %s12, 1
        // Predicated region
        $region13: #{tpu_custom_call.1} parent=11 // pred_check
          %p137 = pneg %p45
        $region14: #{tpu_custom_call.1} parent=11 // pred_check_branch
          %139 = sbr.rel (%p137) target = $region16
        $region15: #{tpu_custom_call.1} parent=11 // pred_region
          _
        $region16: #{tpu_custom_call.1} parent=11 // pred_fallthru
          _
        // Predicated region
        $region17: #{tpu_custom_call.1} parent=11 // pred_check
          %p140 = pneg %p66
        $region18: #{tpu_custom_call.1} parent=11 // pred_check_branch
          %142 = sbr.rel (%p140) target = $region20
        $region19: #{tpu_custom_call.1} parent=11 // pred_region
          _
        $region20: #{tpu_custom_call.1} parent=11 // pred_fallthru
          _
      $region12: #{tpu_custom_call.1} parent=5 // pred_fallthru
        _
      %p143 = scmp.lt.s32.totalorder %s12, 2
      // Predicated region
      $region21: #{tpu_custom_call.1} parent=5 // pred_check
        %p144 = pneg %p143
      $region22: #{tpu_custom_call.1} parent=5 // pred_check_branch
        %146 = sbr.rel (%p144) target = $region24
      $region23: #{tpu_custom_call.1} parent=5 // pred_region
        // Predicated region
        $region25: #{tpu_custom_call.1} parent=23 // pred_check
          %p147 = pneg %p88
        $region26: #{tpu_custom_call.1} parent=23 // pred_check_branch
          %149 = sbr.rel (%p147) target = $region28
        $region27: #{tpu_custom_call.1} parent=23 // pred_region
          %p150 = scmp.lt.s32.totalorder %s19, 0
          %s151 = scalar_select %p150, %s19, 0
          %p152 = scmp.lt.s32.totalorder %s20, 1
          %s153 = scalar_select %p152, %s20, 1
          %s154 = smul.addr %s151, 2
          %s155 = sadd.s32 %s153, %s154
          %s156 = smul.addr %s155, 8
          %s157 = scalar_lea.vmem %s2, %s156
        $region28: #{tpu_custom_call.1} parent=23 // pred_fallthru
          _
      $region24: #{tpu_custom_call.1} parent=5 // pred_fallthru
        _
      %p158 = scmp.le.s32.totalorder 1, %s12
      %p159 = scmp.lt.s32.totalorder %s12, 3
      %p160 = pnand %p158, %p159
      %p161 = pneg %p160
      // Predicated region
      $region29: #{tpu_custom_call.1} parent=5 // pred_check
        _
      $region30: #{tpu_custom_call.1} parent=5 // pred_check_branch
        %163 = sbr.rel (%p160) target = $region32
      $region31: #{tpu_custom_call.1} parent=5 // pred_region
        %s164 = ssub.s32 %s12, 1
        %p165 = pneg %p45
        %p166 = pneg %p42
        %p167 = pneg %p66
        %p168 = pneg %p63
        %p169 = scmp.lt.s32.totalorder %s21, 0
        %s170 = scalar_select %p169, %s21, 0
        %p171 = scmp.lt.s32.totalorder %s22, 1
        %s172 = scalar_select %p171, %s22, 1
        %s173 = smul.addr %s170, 2
        %s174 = sadd.s32 %s172, %s173
        %s175 = smul.addr %s174, 8
        %s176 = scalar_lea.vmem %s2, %s175
        %p177 = pneg %p94
        %p178 = pneg %p91
        %p179 = pneg %p122
        %p180 = pneg %p119
        %s181 = sand.u32 %s109, 1
        %s182 = scalar_lea.sflag [#allocation3], %s181
        %s183 = sand.u32 %s109, 1
        %s184 = smul.addr %s183, 8
        %s185 = scalar_lea.vmem [#allocation2], %s184
        %p186 = scmp.lt.s32.totalorder %s21, 0
        %s187 = scalar_select %p186, %s21, 0
        %p188 = scmp.lt.s32.totalorder %s22, 1
        %s189 = scalar_select %p188, %s22, 1
        %s190 = smul.addr %s187, 2
        %s191 = sadd.s32 %s189, %s190
        %s192 = smul.addr %s191, 8
        %s193 = scalar_lea.vmem %s2, %s192
        %v194 = vld [vmem:[%s0] sm:$0x3f]
        %v195 = vld [vmem:[%s1] sm:$0x3f]
        %v196 = vld [vmem:[%s193] sm:$0x3f]
        %198 = vset.pattern.permute.xlu0 0
        %199 = vperm.xlu0 %198, %v194
        %v200 = vpop.permute.xlu0 %199
        %v202 = vmul.f32 %v196, %v200
        %204 = vset.pattern.permute.xlu0 0
        %205 = vperm.xlu0 %204, %v195
        %v206 = vpop.permute.xlu0 %205
        %v208 = vadd.f32 %v202, %v206
        %209 = vst [vmem:[%s185] sm:$0x3f] %v208
        %s210 = sand.u32 %s109, 1
        %s211 = scalar_lea.sflag [#allocation3], %s210
        %s212 = sand.u32 %s109, 1
        %s213 = smul.addr %s212, 8
        %s214 = scalar_lea.vmem [#allocation2], %s213
        // Predicated region
        $region33: #{tpu_custom_call.1} parent=31 // pred_check
          %p215 = pneg %p119
        $region34: #{tpu_custom_call.1} parent=31 // pred_check_branch
          %217 = sbr.rel (%p215) target = $region36
        $region35: #{tpu_custom_call.1} parent=31 // pred_region
          %219 = vsyncadd %s211, 0
          %s220 = smul.addr %s21, 2
          %s221 = sadd.s32 %s22, %s220
          %s222 = smul.addr %s221, 8
          %s223 = scalar_lea.hbm %s3, %s222
          %s225 = sshll.u32 %s214, 4
          %s226 = int_to_ptr.vmem [resolvable:$true] %s225
          %s227 = sshll.u32 %s223, 4
          %s228 = int_to_ptr.hbm [resolvable:$true] %s227
          %230 = dma.vmem_to_hbm [thread:$0]  %s226, 128, %s228, %s211
        $region36: #{tpu_custom_call.1} parent=31 // pred_fallthru
          _
      $region32: #{tpu_custom_call.1} parent=5 // pred_fallthru
        _
      %p231 = scmp.le.s32.totalorder 2, %s12
      // Predicated region
      $region37: #{tpu_custom_call.1} parent=5 // pred_check
        %p232 = pneg %p231
      $region38: #{tpu_custom_call.1} parent=5 // pred_check_branch
        %234 = sbr.rel (%p232) target = $region40
      $region39: #{tpu_custom_call.1} parent=5 // pred_region
        %s235 = ssub.s32 %s12, 2
        // Predicated region
        $region41: #{tpu_custom_call.1} parent=39 // pred_check
          %p236 = pneg %p125
        $region42: #{tpu_custom_call.1} parent=39 // pred_check_branch
          %238 = sbr.rel (%p236) target = $region44
        $region43: #{tpu_custom_call.1} parent=39 // pred_region
          %s239 = sand.u32 %s110, 1
          %s240 = scalar_lea.sflag [#allocation3], %s239
          %s241 = sand.u32 %s110, 1
          %s242 = smul.addr %s241, 8
          %s243 = scalar_lea.vmem [#allocation2], %s242
          %245 = dma.done %s240, 128
        $region44: #{tpu_custom_call.1} parent=39 // pred_fallthru
          _
      $region40: #{tpu_custom_call.1} parent=5 // pred_fallthru
        _
    $region6: #{tpu_custom_call.1} parent=1 // loop_footer
      %s16 = sadd.s32 1, %s12
    $region7: #{tpu_custom_call.1} parent=1 // loop_footer_branch
      %11 = sbr.rel target = $region3
    $region8: #{tpu_custom_call.1} parent=1 // loop_exit
      _
    %246 = vsyncpa [#allocation3], 1
    %s247 = scalar_lea.sflag [#allocation3], 1
    %248 = vsyncpa %s247, 1

</llo_original>
